<compile_context>
chip_gen: v5e
topology: v5e:2x2
jax: 0.10.0
libtpu: 0.0.40
codegen_flags: <defaults>
</compile_context>

<pallas_src>
import jax
import jax.numpy as jnp
from jax import lax
from jax.experimental import pallas as pl
from jax.experimental.pallas import tpu as pltpu


def _round_up(x, m):
    return (x + m - 1) // m * m


def _iou_kernel(logits_ref, targets_ref, inter_ref, union_ref, acc_i, acc_u):
    n = pl.program_id(1)

    @pl.when(n == 0)
    def _init():
        acc_i[...] = jnp.zeros_like(acc_i)
        acc_u[...] = jnp.zeros_like(acc_u)

    x = logits_ref[...].astype(jnp.float32)        # (1, C, TN), in-kernel upcast
    t = targets_ref[...]                           # (1, 1, TN) int32 (-1 = padding)

    # numerically stable softmax pieces over the class (sublane) axis
    m = jnp.max(x, axis=1, keepdims=True)          # (1, 1, TN)
    e = jnp.exp(x - m)                             # (1, C, TN)  EUP
    denom = jnp.sum(e, axis=1, keepdims=True)      # (1, 1, TN)
    inv = pl.reciprocal(denom, approx=True)        # (1, 1, TN)  EUP
    inv = inv * (2.0 - denom * inv)                # one Newton step -> ~exact

    # one-hot(targets) along the class axis; padded lanes (t == -1) match none
    c_iota = lax.broadcasted_iota(jnp.int32, x.shape, 1)
    known = (t == c_iota).astype(jnp.float32)      # (1, C, TN)

    # per-pixel intersection = softmax(x)[target]; full `pred` never built
    inter_px = jnp.sum(e * known, axis=1, keepdims=True) * inv   # (1, 1, TN)

    # per-pixel union contribution = sum_c pred + sum_c known = denom*inv + 1
    valid = (t >= 0).astype(jnp.float32)           # (1, 1, TN)
    union_px = (denom * inv + 1.0) * valid

    acc_i[...] += inter_px
    acc_u[...] += union_px

    @pl.when(n == pl.num_programs(1) - 1)
    def _finalize():
        inter_ref[...] = jnp.sum(acc_i[...], keepdims=True)   # (1, 1, 1)
        union_ref[...] = jnp.sum(acc_u[...], keepdims=True)   # (1, 1, 1)


def iou_loss(logits, targets, epsilon=1e-7):
    """logits: (B, C, *spatial) float; targets: (B, *spatial) int class labels."""
    B, C = logits.shape[0], logits.shape[1]
    N = 1
    for d in logits.shape[2:]:
        N *= d

    # keep logits in their native dtype (no wrapper-side f32 upcast / extra HBM pass)
    x = logits.reshape(B, C, N)
    t = targets.reshape(B, 1, N).astype(jnp.int32)

    # lane tile: multiple of 128; one logits block capped at ~4 MiB so two
    # double-buffered inputs + scratch stay well inside VMEM even for large C.
    itemsize = jnp.dtype(x.dtype).itemsize
    tn_cap = max(128, ((4 << 20) // max(1, itemsize * C)) // 128 * 128)
    TN = int(min(_round_up(N, 128), tn_cap, 32768))
    N_pad = _round_up(N, TN)
    if N_pad != N:
        x = jnp.pad(x, ((0, 0), (0, 0), (0, N_pad - N)))
        t = jnp.pad(t, ((0, 0), (0, 0), (0, N_pad - N)), constant_values=-1)
    num_tiles = N_pad // TN

    # scoped VMEM sized to the tile (2 inputs x 2 pipeline buffers + scratch),
    # with headroom; clamped so it stays sane on v7x's 64 MiB physical VMEM.
    blk_bytes = C * TN * itemsize + TN * 4
    need = 4 * blk_bytes + 2 * 4 * TN + (1 << 20)
    vmem_limit = int(min(max(16 << 20, 2 * need), 64 << 20))

    inter, union = pl.pallas_call(
        _iou_kernel,
        out_shape=(
            jax.ShapeDtypeStruct((B, 1, 1), jnp.float32),
            jax.ShapeDtypeStruct((B, 1, 1), jnp.float32),
        ),
        grid_spec=pltpu.PrefetchScalarGridSpec(
            num_scalar_prefetch=0,
            grid=(B, num_tiles),
            in_specs=[
                pl.BlockSpec((1, C, TN), lambda b, n: (b, 0, n)),
                pl.BlockSpec((1, 1, TN), lambda b, n: (b, 0, n)),
            ],
            out_specs=[
                pl.BlockSpec((1, 1, 1), lambda b, n: (b, 0, 0)),
                pl.BlockSpec((1, 1, 1), lambda b, n: (b, 0, 0)),
            ],
            scratch_shapes=[
                pltpu.VMEM((1, 1, TN), jnp.float32),
                pltpu.VMEM((1, 1, TN), jnp.float32),
            ],
        ),
        compiler_params=pltpu.CompilerParams(
            dimension_semantics=("parallel", "arbitrary"),
            vmem_limit_bytes=vmem_limit,
        ),
    )(x, t)

    I = jnp.sum(inter)
    U = jnp.sum(union)
    return (2.0 * I + epsilon) / (U + epsilon)


def _reference_iou(logits, targets, epsilon=1e-7):
    B, C = logits.shape[0], logits.shape[1]
    pred = jax.nn.softmax(logits.reshape(B, C, -1).astype(jnp.float32), axis=1)
    known = jax.nn.one_hot(targets.reshape(B, -1), C, axis=1, dtype=jnp.float32)
    inter = jnp.sum(pred * known)
    union = jnp.sum(pred + known)
    return (2.0 * inter + epsilon) / (union + epsilon)


if __name__ == "__main__":
    key = jax.random.PRNGKey(0)
    k1, k2 = jax.random.split(key)

    B, C, H, W = 2, 4, 16, 16
    logits = jax.random.normal(k1, (B, C, H, W), dtype=jnp.float32)
    targets = jax.random.randint(k2, (B, H, W), minval=0, maxval=C, dtype=jnp.int32)

    loss = iou_loss(logits, targets)
    jax.block_until_ready(loss)

    ref = _reference_iou(logits, targets)
    # Newton-refined EUP reciprocal -> near f32-exact vs. the reference
    assert jnp.allclose(loss, ref, atol=1e-5, rtol=1e-5), (loss, ref)

    print("KERNEL_OK")
</pallas_src>

<mosaic_0001>
module attributes {stable_mosaic.version = 11 : i64} {
  func.func @_iou_kernel(%arg0: i32, %arg1: i32, %arg2: memref<1x4x256xf32, #tpu.memory_space<vmem>>, %arg3: memref<1x1x256xi32, #tpu.memory_space<vmem>>, %arg4: memref<1x1x1xf32, #tpu.memory_space<vmem>>, %arg5: memref<1x1x1xf32, #tpu.memory_space<vmem>>, %arg6: memref<1x1x256xf32, #tpu.memory_space<vmem>>, %arg7: memref<1x1x256xf32, #tpu.memory_space<vmem>>) attributes {dimension_semantics = [#tpu.dimension_semantics<parallel>, #tpu.dimension_semantics<arbitrary>], iteration_bounds = array<i64: 2, 1>, scalar_prefetch = 0 : i64, scratch_operands = 2 : i64, tpu.core_type = #tpu.core_type<tc>, window_params = [{transform_indices = @transform_0, window_bounds = array<i64: 1, 4, 256>}, {transform_indices = @transform_1, window_bounds = array<i64: 1, 1, 256>}, {transform_indices = @transform_2, window_bounds = array<i64: 1, 1, 1>}, {transform_indices = @transform_3, window_bounds = array<i64: 1, 1, 1>}]} {
    %c0_i32 = arith.constant 0 : i32
    %0 = arith.cmpi eq, %arg1, %c0_i32 : i32
    %1 = arith.extui %0 : i1 to i32
    %c0_i32_0 = arith.constant 0 : i32
    %2 = arith.cmpi ne, %1, %c0_i32_0 : i32
    scf.if %2 {
      %cst_25 = arith.constant 0.000000e+00 : f32
      %43 = vector.broadcast %cst_25 : f32 to vector<1x1x256xf32>
      %c0_26 = arith.constant 0 : index
      %c0_27 = arith.constant 0 : index
      %c0_28 = arith.constant 0 : index
      %44 = vector.load %arg6[%c0_26, %c0_27, %c0_28] : memref<1x1x256xf32, #tpu.memory_space<vmem>>, vector<1x1x256xf32>
      tpu.vector_store %arg6[%c0_26, %c0_27, %c0_28], %43 {strides = array<i32>} : memref<1x1x256xf32, #tpu.memory_space<vmem>>, vector<1x1x256xf32>,
      %cst_29 = arith.constant 0.000000e+00 : f32
      %45 = vector.broadcast %cst_29 : f32 to vector<1x1x256xf32>
      %c0_30 = arith.constant 0 : index
      %c0_31 = arith.constant 0 : index
      %c0_32 = arith.constant 0 : index
      %46 = vector.load %arg7[%c0_30, %c0_31, %c0_32] : memref<1x1x256xf32, #tpu.memory_space<vmem>>, vector<1x1x256xf32>
      tpu.vector_store %arg7[%c0_30, %c0_31, %c0_32], %45 {strides = array<i32>} : memref<1x1x256xf32, #tpu.memory_space<vmem>>, vector<1x1x256xf32>,
    } else {
    }
    %c0 = arith.constant 0 : index
    %c0_1 = arith.constant 0 : index
    %c0_2 = arith.constant 0 : index
    %3 = vector.load %arg2[%c0, %c0_1, %c0_2] : memref<1x4x256xf32, #tpu.memory_space<vmem>>, vector<1x4x256xf32>
    %c0_3 = arith.constant 0 : index
    %c0_4 = arith.constant 0 : index
    %c0_5 = arith.constant 0 : index
    %4 = vector.load %arg3[%c0_3, %c0_4, %c0_5] : memref<1x1x256xi32, #tpu.memory_space<vmem>>, vector<1x1x256xi32>
    %cst = arith.constant dense<0xFF800000> : vector<1x256xf32>
    %5 = vector.multi_reduction <maximumf>, %3, %cst [1] : vector<1x4x256xf32> to vector<1x256xf32>
    %6 = vector.shape_cast %5 : vector<1x256xf32> to vector<1x1x256xf32>
    %7 = vector.broadcast %6 : vector<1x1x256xf32> to vector<1x4x256xf32>
    %8 = arith.subf %3, %7 : vector<1x4x256xf32>
    %9 = math.exp %8 : vector<1x4x256xf32>
    %cst_6 = arith.constant dense<0.000000e+00> : vector<1x256xf32>
    %10 = vector.multi_reduction <add>, %9, %cst_6 [1] : vector<1x4x256xf32> to vector<1x256xf32>
    %11 = vector.shape_cast %10 : vector<1x256xf32> to vector<1x1x256xf32>
    %12 = tpu.reciprocal %11 {approx = true} : vector<1x1x256xf32> -> vector<1x1x256xf32>
    %13 = arith.mulf %11, %12 : vector<1x1x256xf32>
    %cst_7 = arith.constant 2.000000e+00 : f32
    %14 = vector.broadcast %cst_7 : f32 to vector<1x1x256xf32>
    %15 = arith.subf %14, %13 : vector<1x1x256xf32>
    %16 = arith.mulf %12, %15 : vector<1x1x256xf32>
    %17 = tpu.iota {dimensions = array<i32: 1>} : vector<1x4x256xi32>
    %18 = vector.broadcast %4 : vector<1x1x256xi32> to vector<1x4x256xi32>
    %19 = arith.cmpi eq, %18, %17 : vector<1x4x256xi32>
    %20 = arith.extui %19 : vector<1x4x256xi1> to vector<1x4x256xi32>
    %21 = arith.sitofp %20 : vector<1x4x256xi32> to vector<1x4x256xf32>
    %22 = arith.mulf %9, %21 : vector<1x4x256xf32>
    %cst_8 = arith.constant dense<0.000000e+00> : vector<1x256xf32>
    %23 = vector.multi_reduction <add>, %22, %cst_8 [1] : vector<1x4x256xf32> to vector<1x256xf32>
    %24 = vector.shape_cast %23 : vector<1x256xf32> to vector<1x1x256xf32>
    %25 = arith.mulf %24, %16 : vector<1x1x256xf32>
    %c0_i32_9 = arith.constant 0 : i32
    %26 = vector.broadcast %c0_i32_9 : i32 to vector<1x1x256xi32>
    %27 = arith.cmpi sge, %4, %26 : vector<1x1x256xi32>
    %28 = arith.extui %27 : vector<1x1x256xi1> to vector<1x1x256xi32>
    %29 = arith.sitofp %28 : vector<1x1x256xi32> to vector<1x1x256xf32>
    %30 = arith.mulf %11, %16 : vector<1x1x256xf32>
    %cst_10 = arith.constant 1.000000e+00 : f32
    %31 = vector.broadcast %cst_10 : f32 to vector<1x1x256xf32>
    %32 = arith.addf %30, %31 : vector<1x1x256xf32>
    %33 = arith.mulf %32, %29 : vector<1x1x256xf32>
    %c0_11 = arith.constant 0 : index
    %c0_12 = arith.constant 0 : index
    %c0_13 = arith.constant 0 : index
    %34 = vector.load %arg6[%c0_11, %c0_12, %c0_13] : memref<1x1x256xf32, #tpu.memory_space<vmem>>, vector<1x1x256xf32>
    %35 = arith.addf %34, %25 : vector<1x1x256xf32>
    %c0_14 = arith.constant 0 : index
    %c0_15 = arith.constant 0 : index
    %c0_16 = arith.constant 0 : index
    %36 = vector.load %arg6[%c0_14, %c0_15, %c0_16] : memref<1x1x256xf32, #tpu.memory_space<vmem>>, vector<1x1x256xf32>
    tpu.vector_store %arg6[%c0_14, %c0_15, %c0_16], %35 {strides = array<i32>} : memref<1x1x256xf32, #tpu.memory_space<vmem>>, vector<1x1x256xf32>,
    %c0_17 = arith.constant 0 : index
    %c0_18 = arith.constant 0 : index
    %c0_19 = arith.constant 0 : index
    %37 = vector.load %arg7[%c0_17, %c0_18, %c0_19] : memref<1x1x256xf32, #tpu.memory_space<vmem>>, vector<1x1x256xf32>
    %38 = arith.addf %37, %33 : vector<1x1x256xf32>
    %c0_20 = arith.constant 0 : index
    %c0_21 = arith.constant 0 : index
    %c0_22 = arith.constant 0 : index
    %39 = vector.load %arg7[%c0_20, %c0_21, %c0_22] : memref<1x1x256xf32, #tpu.memory_space<vmem>>, vector<1x1x256xf32>
    tpu.vector_store %arg7[%c0_20, %c0_21, %c0_22], %38 {strides = array<i32>} : memref<1x1x256xf32, #tpu.memory_space<vmem>>, vector<1x1x256xf32>,
    %c0_i32_23 = arith.constant 0 : i32
    %40 = arith.cmpi eq, %arg1, %c0_i32_23 : i32
    %41 = arith.extui %40 : i1 to i32
    %c0_i32_24 = arith.constant 0 : i32
    %42 = arith.cmpi ne, %41, %c0_i32_24 : i32
    scf.if %42 {
      %c0_25 = arith.constant 0 : index
      %c0_26 = arith.constant 0 : index
      %c0_27 = arith.constant 0 : index
      %43 = vector.load %arg6[%c0_25, %c0_26, %c0_27] : memref<1x1x256xf32, #tpu.memory_space<vmem>>, vector<1x1x256xf32>
      %44 = vector.shape_cast %43 : vector<1x1x256xf32> to vector<1x1x1x256xf32>
      %cst_28 = arith.constant dense<0.000000e+00> : vector<1xf32>
      %45 = vector.multi_reduction <add>, %44, %cst_28 [1, 2, 3] : vector<1x1x1x256xf32> to vector<1xf32>
      %46 = vector.shape_cast %45 : vector<1xf32> to vector<1x1x1x1xf32>
      %47 = vector.extract %46[0, 0, 0, 0] : f32 from vector<1x1x1x1xf32>
      %48 = vector.broadcast %47 : f32 to vector<1x1x1xf32>
      %c0_29 = arith.constant 0 : index
      %c0_30 = arith.constant 0 : index
      %c0_31 = arith.constant 0 : index
      %49 = vector.load %arg4[%c0_29, %c0_30, %c0_31] : memref<1x1x1xf32, #tpu.memory_space<vmem>>, vector<1x1x1xf32>
      tpu.vector_store %arg4[%c0_29, %c0_30, %c0_31], %48 {strides = array<i32>} : memref<1x1x1xf32, #tpu.memory_space<vmem>>, vector<1x1x1xf32>,
      %c0_32 = arith.constant 0 : index
      %c0_33 = arith.constant 0 : index
      %c0_34 = arith.constant 0 : index
      %50 = vector.load %arg7[%c0_32, %c0_33, %c0_34] : memref<1x1x256xf32, #tpu.memory_space<vmem>>, vector<1x1x256xf32>
      %51 = vector.shape_cast %50 : vector<1x1x256xf32> to vector<1x1x1x256xf32>
      %cst_35 = arith.constant dense<0.000000e+00> : vector<1xf32>
      %52 = vector.multi_reduction <add>, %51, %cst_35 [1, 2, 3] : vector<1x1x1x256xf32> to vector<1xf32>
      %53 = vector.shape_cast %52 : vector<1xf32> to vector<1x1x1x1xf32>
      %54 = vector.extract %53[0, 0, 0, 0] : f32 from vector<1x1x1x1xf32>
      %55 = vector.broadcast %54 : f32 to vector<1x1x1xf32>
      %c0_36 = arith.constant 0 : index
      %c0_37 = arith.constant 0 : index
      %c0_38 = arith.constant 0 : index
      %56 = vector.load %arg5[%c0_36, %c0_37, %c0_38] : memref<1x1x1xf32, #tpu.memory_space<vmem>>, vector<1x1x1xf32>
      tpu.vector_store %arg5[%c0_36, %c0_37, %c0_38], %55 {strides = array<i32>} : memref<1x1x1xf32, #tpu.memory_space<vmem>>, vector<1x1x1xf32>,
    } else {
    }
    return
  }
  func.func @transform_0(%arg0: i32, %arg1: i32) -> (i32, i32, i32) {
    %c0_i32 = arith.constant 0 : i32
    %c0_i32_0 = arith.constant 0 : i32
    return %arg0, %c0_i32, %arg1 : i32, i32, i32
  }
  func.func @transform_1(%arg0: i32, %arg1: i32) -> (i32, i32, i32) {
    %c0_i32 = arith.constant 0 : i32
    %c0_i32_0 = arith.constant 0 : i32
    return %arg0, %c0_i32, %arg1 : i32, i32, i32
  }
  func.func @transform_2(%arg0: i32, %arg1: i32) -> (i32, i32, i32) {
    %c0_i32 = arith.constant 0 : i32
    %c0_i32_0 = arith.constant 0 : i32
    %c0_i32_1 = arith.constant 0 : i32
    return %arg0, %c0_i32, %c0_i32_0 : i32, i32, i32
  }
  func.func @transform_3(%arg0: i32, %arg1: i32) -> (i32, i32, i32) {
    %c0_i32 = arith.constant 0 : i32
    %c0_i32_0 = arith.constant 0 : i32
    %c0_i32_1 = arith.constant 0 : i32
    return %arg0, %c0_i32, %c0_i32_0 : i32, i32, i32
  }
}

</mosaic_0001>

<llo_original>
// kernel: tpu_custom_call.1
$region0: #{tpu_custom_call.1}
  #allocation0 [shape = 'u32[]', space=smem, size = 0x4, offset = 0x4, fixed_abs, tag = 'smem constant byte address 0x4 - core index']
  #allocation1 [shape = 'u32[72,128]{1,0:T(1,128)}', space=vmem, size = 0x9000, scoped, tag = 'internal scratch']
  #allocation2 [shape = 'f32[1,1,256]{2,1,0:T(1,128)}', space=vmem, size = 0x400, scoped, tag = 'scratch operand']
  #allocation3 [shape = 'f32[1,1,256]{2,1,0:T(1,128)}', space=vmem, size = 0x400, scoped, tag = 'scratch operand']
  %s0 = inlined_call_operand.hbm [shape: f32[2,4,256], index: 0, kind: input, shape index: {}]
  %s1 = inlined_call_operand.hbm [shape: s32[2,1,256], index: 1, kind: input, shape index: {}]
  %s2 = inlined_call_operand.vmem [shape: f32[2,1,1], index: 2, kind: output, shape index: {0}]
  %s3 = inlined_call_operand.vmem [shape: f32[2,1,1], index: 3, kind: output, shape index: {1}]
  %4 = xla_tuple %s2, %s3
  %s5 = sld [smem:[#allocation0]]
  $region65: #{tpu_custom_call.1} parent=0
    _
  %s7 = ssub.s32 1, %s5
  %s8 = scalar_select 0, %s7, %s5
  $region1: #{tpu_custom_call.1} parent=0
    #allocation4 [shape = 'u8[8192]{0}', space=vmem, size = 0x2000, scoped, tag = 'input window, operand 0']
    #allocation5 [shape = 's32[2]{0}', space=sflag, size = 0x8, scoped, tag = 'scoped memory for tpu_custom_call.1']
    #allocation6 [shape = 'u8[2048]{0}', space=vmem, size = 0x800, scoped, tag = 'input window, operand 1']
    #allocation7 [shape = 's32[2]{0}', space=sflag, size = 0x8, scoped, tag = 'scoped memory for tpu_custom_call.1']
    %9 = vsyncpa [#allocation5], 0
    %s10 = scalar_lea.sflag [#allocation5], 1
    %11 = vsyncpa %s10, 0
    %12 = vsyncpa [#allocation7], 0
    %s13 = scalar_lea.sflag [#allocation7], 1
    %14 = vsyncpa %s13, 0
    loop: start=0, step=1, limit=4
    $region2: #{tpu_custom_call.1} parent=1 // loop_pre_header
      _
    $region3: #{tpu_custom_call.1} parent=1 // loop_header
      %s16 = sphi 0, %s20
      %p17 = scmp.ge.s32.totalorder %s16, 4
      %s23 = sphi 0, %s35
      %s24 = sphi 0, %s31
      %s25 = sphi 0, %s23
      %s26 = sphi 0, %s24
      %s27 = sphi 0, %s25
      %s28 = sphi 0, %s26
      %s40 = sphi 0, %s42
      %s43 = sphi 0, %s40
      %s44 = sphi 0, %s43
      %s60 = sphi 0, %s44
      %s68 = sphi 0, %s70
      %s71 = sphi 0, %s68
      %s72 = sphi 0, %s71
      %s88 = sphi 0, %s72
      %s94 = sphi 0, %s96
      %s97 = sphi 0, %s94
      %s98 = sphi 0, %s97
      %s114 = sphi 0, %s98
      %s120 = sphi 0, %s122
      %s123 = sphi 0, %s120
      %s124 = sphi 0, %s123
      %s140 = sphi 0, %s124
    $region4: #{tpu_custom_call.1} parent=1 // loop_header_branch
      %19 = sbr.rel (%p17) target = $region8
    $region5: #{tpu_custom_call.1} parent=1 // loop_body
      %s21 = ssub.s32 %s16, 1
      %s22 = ssub.s32 %s16, 2
      %s29 = sadd.s32 1, %s24
      %p30 = scmp.ge.s32.totalorder %s29, 1
      %s31 = scalar_select %p30, 0, %s29
      %s32 = sadd.s32 1, %s23
      %s33 = scalar_select %p30, %s32, %s23
      %p34 = scmp.ge.s32.totalorder %s33, 2
      %s35 = scalar_select %p34, 0, %s33
      %s36 = ssub.s32 %s23, %s35
      %s37 = ssub.s32 %s24, %s31
      %s38 = sor.u32 %s36, %s37
      %p39 = scmp.eq.s32.totalorder %s38, 0
      %s41 = sadd.s32 %s40, 1
      %s42 = scalar_select %p39, %s40, %s41
      %p45 = pneg %p39
      %p46 = scmp.eq.s32.totalorder %s16, 1
      %p47 = por %p45, %p46
      %p48 = scmp.ne.s32.totalorder %s40, %s43
      %p49 = scmp.eq.s32.totalorder %s16, 0
      %p50 = por %p48, %p49
      %p51 = scmp.ne.s32.totalorder %s40, %s43
      %p52 = scmp.eq.s32.totalorder %s21, 1
      %p53 = por %p51, %p52
      %p54 = scmp.ne.s32.totalorder %s43, %s44
      %p55 = scmp.eq.s32.totalorder %s21, 0
      %p56 = por %p54, %p55
      %p57 = scmp.ne.s32.totalorder %s43, %s44
      %p58 = scmp.eq.s32.totalorder %s22, 1
      %p59 = por %p57, %p58
      %p61 = scmp.ne.s32.totalorder %s44, %s60
      %p62 = scmp.eq.s32.totalorder %s22, 0
      %p63 = por %p61, %p62
      %s64 = ssub.s32 %s23, %s35
      %s65 = ssub.s32 %s24, %s31
      %s66 = sor.u32 %s64, %s65
      %p67 = scmp.eq.s32.totalorder %s66, 0
      %s69 = sadd.s32 %s68, 1
      %s70 = scalar_select %p67, %s68, %s69
      %p73 = pneg %p67
      %p74 = scmp.eq.s32.totalorder %s16, 1
      %p75 = por %p73, %p74
      %p76 = scmp.ne.s32.totalorder %s68, %s71
      %p77 = scmp.eq.s32.totalorder %s16, 0
      %p78 = por %p76, %p77
      %p79 = scmp.ne.s32.totalorder %s68, %s71
      %p80 = scmp.eq.s32.totalorder %s21, 1
      %p81 = por %p79, %p80
      %p82 = scmp.ne.s32.totalorder %s71, %s72
      %p83 = scmp.eq.s32.totalorder %s21, 0
      %p84 = por %p82, %p83
      %p85 = scmp.ne.s32.totalorder %s71, %s72
      %p86 = scmp.eq.s32.totalorder %s22, 1
      %p87 = por %p85, %p86
      %p89 = scmp.ne.s32.totalorder %s72, %s88
      %p90 = scmp.eq.s32.totalorder %s22, 0
      %p91 = por %p89, %p90
      %s92 = ssub.s32 %s23, %s35
      %p93 = scmp.eq.s32.totalorder %s92, 0
      %s95 = sadd.s32 %s94, 1
      %s96 = scalar_select %p93, %s94, %s95
      %p99 = pneg %p93
      %p100 = scmp.eq.s32.totalorder %s16, 1
      %p101 = por %p99, %p100
      %p102 = scmp.ne.s32.totalorder %s94, %s97
      %p103 = scmp.eq.s32.totalorder %s16, 0
      %p104 = por %p102, %p103
      %p105 = scmp.ne.s32.totalorder %s94, %s97
      %p106 = scmp.eq.s32.totalorder %s21, 1
      %p107 = por %p105, %p106
      %p108 = scmp.ne.s32.totalorder %s97, %s98
      %p109 = scmp.eq.s32.totalorder %s21, 0
      %p110 = por %p108, %p109
      %p111 = scmp.ne.s32.totalorder %s97, %s98
      %p112 = scmp.eq.s32.totalorder %s22, 1
      %p113 = por %p111, %p112
      %p115 = scmp.ne.s32.totalorder %s98, %s114
      %p116 = scmp.eq.s32.totalorder %s22, 0
      %p117 = por %p115, %p116
      %s118 = ssub.s32 %s23, %s35
      %p119 = scmp.eq.s32.totalorder %s118, 0
      %s121 = sadd.s32 %s120, 1
      %s122 = scalar_select %p119, %s120, %s121
      %p125 = pneg %p119
      %p126 = scmp.eq.s32.totalorder %s16, 1
      %p127 = por %p125, %p126
      %p128 = scmp.ne.s32.totalorder %s120, %s123
      %p129 = scmp.eq.s32.totalorder %s16, 0
      %p130 = por %p128, %p129
      %p131 = scmp.ne.s32.totalorder %s120, %s123
      %p132 = scmp.eq.s32.totalorder %s21, 1
      %p133 = por %p131, %p132
      %p134 = scmp.ne.s32.totalorder %s123, %s124
      %p135 = scmp.eq.s32.totalorder %s21, 0
      %p136 = por %p134, %p135
      %p137 = scmp.ne.s32.totalorder %s123, %s124
      %p138 = scmp.eq.s32.totalorder %s22, 1
      %p139 = por %p137, %p138
      %p141 = scmp.ne.s32.totalorder %s124, %s140
      %p142 = scmp.eq.s32.totalorder %s22, 0
      %p143 = por %p141, %p142
      %p144 = scmp.le.s32.totalorder 1, %s16
      %p145 = scmp.lt.s32.totalorder %s16, 3
      %p146 = pnand %p144, %p145
      %p147 = pneg %p146
      // Predicated region
      $region9: #{tpu_custom_call.1} parent=5 // pred_check
        _
      $region10: #{tpu_custom_call.1} parent=5 // pred_check_branch
        %149 = sbr.rel (%p146) target = $region12
      $region11: #{tpu_custom_call.1} parent=5 // pred_region
        %s150 = ssub.s32 %s16, 1
      $region12: #{tpu_custom_call.1} parent=5 // pred_fallthru
        _
      %p151 = scmp.lt.s32.totalorder %s16, 2
      // Predicated region
      $region13: #{tpu_custom_call.1} parent=5 // pred_check
        %p152 = pneg %p151
      $region14: #{tpu_custom_call.1} parent=5 // pred_check_branch
        %154 = sbr.rel (%p152) target = $region16
      $region15: #{tpu_custom_call.1} parent=5 // pred_region
        // Predicated region
        $region17: #{tpu_custom_call.1} parent=15 // pred_check
          %p155 = pneg %p50
        $region18: #{tpu_custom_call.1} parent=15 // pred_check_branch
          %157 = sbr.rel (%p155) target = $region20
        $region19: #{tpu_custom_call.1} parent=15 // pred_region
          %s158 = sand.u32 %s40, 1
          %s159 = scalar_lea.sflag [#allocation5], %s158
          %s160 = sand.u32 %s40, 1
          %s161 = smul.addr %s160, 8
          %s162 = scalar_lea.vmem [#allocation4], %s161
          %s163 = smul.u32 2, %s24
          %165 = vsyncadd %s159, 0
          %s166 = smul.addr %s23, 2
          %s167 = sadd.s32 %s163, %s166
          %s168 = smul.addr %s167, 4
          %s169 = scalar_lea.hbm %s0, %s168
          %s171 = sshll.u32 %s169, 4
          %s172 = int_to_ptr.hbm [resolvable:$true] %s171
          %s173 = sshll.u32 %s162, 4
          %s174 = int_to_ptr.vmem [resolvable:$true] %s173
          %176 = dma.hbm_to_vmem [thread:$0]  %s172, 128, %s174, %s159
        $region20: #{tpu_custom_call.1} parent=15 // pred_fallthru
          _
        // Predicated region
        $region21: #{tpu_custom_call.1} parent=15 // pred_check
          %p177 = pneg %p78
        $region22: #{tpu_custom_call.1} parent=15 // pred_check_branch
          %179 = sbr.rel (%p177) target = $region24
        $region23: #{tpu_custom_call.1} parent=15 // pred_region
          %s180 = sand.u32 %s68, 1
          %s181 = scalar_lea.sflag [#allocation7], %s180
          %s182 = sand.u32 %s68, 1
          %s183 = smul.addr %s182, 2
          %s184 = scalar_lea.vmem [#allocation6], %s183
          %s185 = smul.u32 2, %s24
          %187 = vsyncadd %s181, 0
          %s188 = smul.addr %s23, 2
          %s189 = sadd.s32 %s185, %s188
          %s190 = scalar_lea.hbm %s1, %s189
          %s192 = sshll.u32 %s190, 4
          %s193 = int_to_ptr.hbm [resolvable:$true] %s192
          %s194 = sshll.u32 %s184, 4
          %s195 = int_to_ptr.vmem [resolvable:$true] %s194
          %197 = dma.hbm_to_vmem [thread:$0]  %s193, 32, %s195, %s181
        $region24: #{tpu_custom_call.1} parent=15 // pred_fallthru
          _
      $region16: #{tpu_custom_call.1} parent=5 // pred_fallthru
        _
      %p198 = scmp.le.s32.totalorder 1, %s16
      %p199 = scmp.lt.s32.totalorder %s16, 3
      %p200 = pnand %p198, %p199
      %p201 = pneg %p200
      // Predicated region
      $region25: #{tpu_custom_call.1} parent=5 // pred_check
        _
      $region26: #{tpu_custom_call.1} parent=5 // pred_check_branch
        %203 = sbr.rel (%p200) target = $region28
      $region27: #{tpu_custom_call.1} parent=5 // pred_region
        %s204 = ssub.s32 %s16, 1
        %s205 = sand.u32 %s43, 1
        %s206 = scalar_lea.sflag [#allocation5], %s205
        %s207 = sand.u32 %s43, 1
        %s208 = smul.addr %s207, 8
        %s209 = scalar_lea.vmem [#allocation4], %s208
        // Predicated region
        $region29: #{tpu_custom_call.1} parent=27 // pred_check
          %p210 = pneg %p56
        $region30: #{tpu_custom_call.1} parent=27 // pred_check_branch
          %212 = sbr.rel (%p210) target = $region32
        $region31: #{tpu_custom_call.1} parent=27 // pred_region
          %214 = dma.done %s206, 128
        $region32: #{tpu_custom_call.1} parent=27 // pred_fallthru
          _
        %s215 = sand.u32 %s71, 1
        %s216 = scalar_lea.sflag [#allocation7], %s215
        %s217 = sand.u32 %s71, 1
        %s218 = smul.addr %s217, 2
        %s219 = scalar_lea.vmem [#allocation6], %s218
        // Predicated region
        $region33: #{tpu_custom_call.1} parent=27 // pred_check
          %p220 = pneg %p84
        $region34: #{tpu_custom_call.1} parent=27 // pred_check_branch
          %222 = sbr.rel (%p220) target = $region36
        $region35: #{tpu_custom_call.1} parent=27 // pred_region
          %224 = dma.done %s216, 32
        $region36: #{tpu_custom_call.1} parent=27 // pred_fallthru
          _
        %s225 = sand.u32 %s43, 1
        %s226 = scalar_lea.sflag [#allocation5], %s225
        %s227 = sand.u32 %s43, 1
        %s228 = smul.addr %s227, 8
        %s229 = scalar_lea.vmem [#allocation4], %s228
        %p230 = pneg %p56
        %p231 = pneg %p53
        %s232 = sand.u32 %s71, 1
        %s233 = scalar_lea.sflag [#allocation7], %s232
        %s234 = sand.u32 %s71, 1
        %s235 = smul.addr %s234, 2
        %s236 = scalar_lea.vmem [#allocation6], %s235
        %p237 = pneg %p84
        %p238 = pneg %p81
        %p239 = pneg %p110
        %p240 = pneg %p107
        %p241 = scmp.lt.s32.totalorder %s25, 1
        %s242 = scalar_select %p241, %s25, 1
        %s243 = scalar_lea.vmem %s2, %s242
        %p244 = pneg %p136
        %p245 = pneg %p133
        %p246 = scmp.lt.s32.totalorder %s25, 1
        %s247 = scalar_select %p246, %s25, 1
        %s248 = scalar_lea.vmem %s3, %s247
        %s249 = smul.u32 2, %s26
        %s250 = smul.u32 2, %s26
        %p251 = scmp.lt.s32.totalorder %s25, 1
        %s252 = scalar_select %p251, %s25, 1
        %s253 = scalar_lea.vmem %s2, %s252
        %p254 = scmp.lt.s32.totalorder %s25, 1
        %s255 = scalar_select %p254, %s25, 1
        %s256 = scalar_lea.vmem %s3, %s255
        %p257 = scmp.eq.s32.totalorder %s26, 0
        // Predicated region
        $region37: #{tpu_custom_call.1} parent=27 // pred_check
          %p258 = pneg %p257
        $region38: #{tpu_custom_call.1} parent=27 // pred_check_branch
          %260 = sbr.rel (%p258) target = $region40
        $region39: #{tpu_custom_call.1} parent=27 // pred_region
          %v261 = vlaneseq
          %vm262 = vcmp.ge.s32.totalorder %v261, 0
          %vm263 = vcmp.lt.s32.totalorder %v261, 256
          %vm264 = vmand %vm262, %vm263
          %265 = vst.msk [vmem:[#allocation2] sm:$0x3] %vm264, 0.0
          %266 = vst.msk [vmem:[#allocation3] sm:$0x3] %vm264, 0.0
        $region40: #{tpu_custom_call.1} parent=27 // pred_fallthru
          _
        %v267 = vld [vmem:[%s209] sm:$0xff]
        %v268 = vld [vmem:[%s219] sm:$0x3]
        %270 = vst [vmem:[#allocation1] ss:$2 sm:$0xff] %v267
        %v271 = vld.sshfl [vmem:[#allocation1] sm:$0xff pattern:$0x75316420]
        %v272 = vld.sshfl [vmem:[#allocation1 + $0x8] sm:$0xff pattern:$0x75316420]
        %vm275 = vcmask 1043456
        %v276 = vsel %vm275, %v271, -inf
        %v277 = vrot.slane %v276, 4
        %v278 = vmax.f32 %v276, %v277
        %v279 = vrot.slane %v278, 2
        %v280 = vmax.f32 %v278, %v279
        %v281 = vrot.slane %v280, 1
        %v282 = vmax.f32 %v280, %v281
        %v283 = vsel %vm275, %v272, -inf
        %v284 = vrot.slane %v283, 4
        %v285 = vmax.f32 %v283, %v284
        %v286 = vrot.slane %v285, 2
        %v287 = vmax.f32 %v285, %v286
        %v288 = vrot.slane %v287, 1
        %v289 = vmax.f32 %v287, %v288
        %v292 = vrot.slane %v289, 4
        %v293 = vsel %vm275, %v282, %v292
        %v295 = vsub.f32 %v267, %v293
        %v296 = vmul.f32 %v295, 1.442695
        %v297 = vpow.pop %v296
        %299 = vst [vmem:[#allocation1] ss:$2 sm:$0xff] %v297
        %v300 = vld.sshfl [vmem:[#allocation1] sm:$0xff pattern:$0x75316420]
        %v301 = vld.sshfl [vmem:[#allocation1 + $0x8] sm:$0xff pattern:$0x75316420]
        %v304 = vsel %vm275, %v300, 0.0
        %v305 = vrot.slane %v304, 4
        %v306 = vadd.f32 %v304, %v305
        %v307 = vrot.slane %v306, 2
        %v308 = vadd.f32 %v306, %v307
        %v309 = vrot.slane %v308, 1
        %v310 = vadd.f32 %v308, %v309
        %v311 = vsel %vm275, %v301, 0.0
        %v312 = vrot.slane %v311, 4
        %v313 = vadd.f32 %v311, %v312
        %v314 = vrot.slane %v313, 2
        %v315 = vadd.f32 %v313, %v314
        %v316 = vrot.slane %v315, 1
        %v317 = vadd.f32 %v315, %v316
        %v318 = vrcp.pop %v310
        %v319 = vrcp.pop %v317
        %v320 = vmul.f32 %v310, %v318
        %v321 = vmul.f32 %v317, %v319
        %v322 = vsub.f32 2.0, %v320
        %v323 = vsub.f32 2.0, %v321
        %v324 = vmul.f32 %v318, %v322
        %v325 = vmul.f32 %v319, %v323
        %v326 = vlaneseq
        %v327 = vshrl.u32 %v326, 7
        %v328 = vperm.slane %v268, 0
        %v329 = vperm.slane %v268, 1
        %vm330 = vcmp.eq.s32.totalorder %v328, %v327
        %vm331 = vcmp.eq.s32.totalorder %v329, %v327
        %v332 = vsel %vm330, 1, 0
        %v333 = vsel %vm331, 1, 0
        %v334 = vcvt.s32.f32 %v332
        %v335 = vcvt.s32.f32 %v333
        %v338 = vrot.slane %v335, 4
        %v339 = vsel %vm275, %v334, %v338
        %v341 = vmul.f32 %v297, %v339
        %343 = vst [vmem:[#allocation1] ss:$2 sm:$0xff] %v341
        %v344 = vld.sshfl [vmem:[#allocation1] sm:$0xff pattern:$0x75316420]
        %v345 = vld.sshfl [vmem:[#allocation1 + $0x8] sm:$0xff pattern:$0x75316420]
        %v348 = vsel %vm275, %v344, 0.0
        %v349 = vrot.slane %v348, 4
        %v350 = vadd.f32 %v348, %v349
        %v351 = vrot.slane %v350, 2
        %v352 = vadd.f32 %v350, %v351
        %v353 = vrot.slane %v352, 1
        %v354 = vadd.f32 %v352, %v353
        %v355 = vsel %vm275, %v345, 0.0
        %v356 = vrot.slane %v355, 4
        %v357 = vadd.f32 %v355, %v356
        %v358 = vrot.slane %v357, 2
        %v359 = vadd.f32 %v357, %v358
        %v360 = vrot.slane %v359, 1
        %v361 = vadd.f32 %v359, %v360
        %v362 = vmul.f32 %v354, %v324
        %v363 = vmul.f32 %v361, %v325
        %vm364 = vcmp.ge.s32.totalorder %v268, 0
        %v365 = vsel %vm364, 1, 0
        %v366 = vcvt.s32.f32 %v365
        %v367 = vmul.f32 %v310, %v324
        %v368 = vmul.f32 %v317, %v325
        %v369 = vadd.f32 %v367, 1.0
        %v370 = vadd.f32 %v368, 1.0
        %v372 = vperm.slane %v366, 0
        %v373 = vperm.slane %v366, 1
        %v376 = vmul.f32 %v369, %v372
        %v377 = vmul.f32 %v370, %v373
        %v378 = vld [vmem:[#allocation2] sm:$0x3]
        %v381 = vrot.slane %v363, 7
        %vm382 = vcmask 1040384
        %v383 = vsel %vm382, %v362, %v381
        %v385 = vadd.f32 %v378, %v383
        %v386 = vlaneseq
        %vm387 = vcmp.ge.s32.totalorder %v386, 0
        %vm388 = vcmp.lt.s32.totalorder %v386, 256
        %vm389 = vmand %vm387, %vm388
        %390 = vst.msk [vmem:[#allocation2] sm:$0x3] %vm389, %v385
        %v391 = vld [vmem:[#allocation3] sm:$0x3]
        %v394 = vrot.slane %v377, 7
        %v395 = vsel %vm382, %v376, %v394
        %v397 = vadd.f32 %v391, %v395
        %398 = vst.msk [vmem:[#allocation3] sm:$0x3] %vm389, %v397
        // Predicated region
        $region41: #{tpu_custom_call.1} parent=27 // pred_check
          %p399 = pneg %p257
        $region42: #{tpu_custom_call.1} parent=27 // pred_check_branch
          %401 = sbr.rel (%p399) target = $region44
        $region43: #{tpu_custom_call.1} parent=27 // pred_region
          %v402 = vld [vmem:[#allocation2] sm:$0x3]
          %v404 = vperm.slane %v402, 0
          %v405 = vperm.slane %v402, 1
          %v408 = vsel %vm382, %v404, 0.0
          %v409 = vsel %vm382, %v405, 0.0
          %v410 = vadd.f32 %v408, %v409
          %411 = vadd.xlane.f32.xlu0 %v410
          %v412 = vpop.xlane.xlu0 %411
          %v413 = vrot.slane %v412, 4
          %v414 = vadd.f32 %v412, %v413
          %v415 = vrot.slane %v414, 2
          %v416 = vadd.f32 %v414, %v415
          %v417 = vrot.slane %v416, 1
          %v418 = vadd.f32 %v416, %v417
          %s419 = vtos %v418
          %v420 = vstv %s419
          %vm421 = vcmask 0
          %422 = vst.msk [vmem:[%s253] sm:$0x1] %vm421, %v420
          %v423 = vld [vmem:[#allocation3] sm:$0x3]
          %v425 = vperm.slane %v423, 0
          %v426 = vperm.slane %v423, 1
          %v429 = vsel %vm382, %v425, 0.0
          %v430 = vsel %vm382, %v426, 0.0
          %v431 = vadd.f32 %v429, %v430
          %432 = vadd.xlane.f32.xlu0 %v431
          %v433 = vpop.xlane.xlu0 %432
          %v434 = vrot.slane %v433, 4
          %v435 = vadd.f32 %v433, %v434
          %v436 = vrot.slane %v435, 2
          %v437 = vadd.f32 %v435, %v436
          %v438 = vrot.slane %v437, 1
          %v439 = vadd.f32 %v437, %v438
          %s440 = vtos %v439
          %v441 = vstv %s440
          %442 = vst.msk [vmem:[%s256] sm:$0x1] %vm421, %v441
        $region44: #{tpu_custom_call.1} parent=27 // pred_fallthru
          _
        %p443 = scmp.lt.s32.totalorder %s25, 1
        %s444 = scalar_select %p443, %s25, 1
        %s445 = scalar_lea.vmem %s2, %s444
        %p446 = scmp.lt.s32.totalorder %s25, 1
        %s447 = scalar_select %p446, %s25, 1
        %s448 = scalar_lea.vmem %s3, %s447
        // Predicated region
        $region45: #{tpu_custom_call.1} parent=27 // pred_check
          %p449 = pneg %p107
        $region46: #{tpu_custom_call.1} parent=27 // pred_check_branch
          %451 = sbr.rel (%p449) target = $region48
        $region47: #{tpu_custom_call.1} parent=27 // pred_region
          _
        $region48: #{tpu_custom_call.1} parent=27 // pred_fallthru
          _
        // Predicated region
        $region49: #{tpu_custom_call.1} parent=27 // pred_check
          %p452 = pneg %p133
        $region50: #{tpu_custom_call.1} parent=27 // pred_check_branch
          %454 = sbr.rel (%p452) target = $region52
        $region51: #{tpu_custom_call.1} parent=27 // pred_region
          _
        $region52: #{tpu_custom_call.1} parent=27 // pred_fallthru
          _
      $region28: #{tpu_custom_call.1} parent=5 // pred_fallthru
        _
      %p455 = scmp.le.s32.totalorder 2, %s16
      // Predicated region
      $region53: #{tpu_custom_call.1} parent=5 // pred_check
        %p456 = pneg %p455
      $region54: #{tpu_custom_call.1} parent=5 // pred_check_branch
        %458 = sbr.rel (%p456) target = $region56
      $region55: #{tpu_custom_call.1} parent=5 // pred_region
        %s459 = ssub.s32 %s16, 2
        // Predicated region
        $region57: #{tpu_custom_call.1} parent=55 // pred_check
          %p460 = pneg %p113
        $region58: #{tpu_custom_call.1} parent=55 // pred_check_branch
          %462 = sbr.rel (%p460) target = $region60
        $region59: #{tpu_custom_call.1} parent=55 // pred_region
          %p463 = scmp.lt.s32.totalorder %s27, 1
          %s464 = scalar_select %p463, %s27, 1
          %s465 = scalar_lea.vmem %s2, %s464
        $region60: #{tpu_custom_call.1} parent=55 // pred_fallthru
          _
        // Predicated region
        $region61: #{tpu_custom_call.1} parent=55 // pred_check
          %p466 = pneg %p139
        $region62: #{tpu_custom_call.1} parent=55 // pred_check_branch
          %468 = sbr.rel (%p466) target = $region64
        $region63: #{tpu_custom_call.1} parent=55 // pred_region
          %p469 = scmp.lt.s32.totalorder %s27, 1
          %s470 = scalar_select %p469, %s27, 1
          %s471 = scalar_lea.vmem %s3, %s470
        $region64: #{tpu_custom_call.1} parent=55 // pred_fallthru
          _
      $region56: #{tpu_custom_call.1} parent=5 // pred_fallthru
        _
    $region6: #{tpu_custom_call.1} parent=1 // loop_footer
      %s20 = sadd.s32 1, %s16
    $region7: #{tpu_custom_call.1} parent=1 // loop_footer_branch
      %15 = sbr.rel target = $region3
    $region8: #{tpu_custom_call.1} parent=1 // loop_exit
      _
    %472 = vsyncpa [#allocation5], 1
    %s473 = scalar_lea.sflag [#allocation5], 1
    %474 = vsyncpa %s473, 1
    %475 = vsyncpa [#allocation7], 1
    %s476 = scalar_lea.sflag [#allocation7], 1
    %477 = vsyncpa %s476, 1

</llo_original>
